<compile_context>
chip_gen: v7x
topology: tpu7x:2x2x1
jax: 0.10.0
libtpu: 0.0.40
codegen_flags: <defaults>
</compile_context>

<pallas_src>
import numpy as np
import jax
import jax.numpy as jnp
from jax.experimental import pallas as pl
from jax.experimental.pallas import tpu as pltpu

# ---------------- configuration (small synthetic shapes) ----------------
EMB_DIM = 8
CAT_FEATURES = {"cat_a": (10, 0), "cat_b": (20, 1), "cat_c": (30, 2)}  # name: (vocab, col)
CON_FEATURES = {"con_a": 3, "con_b": 4}                                 # name: col
VAR_FEATURES = {"var_a": (15, 5, 4)}                                    # name: (vocab, start_col, max_len)
NUM_TASKS = 2
NUM_LEVELS = 2
SPECIFIC_EXPERT_NUM = 1
SHARED_EXPERT_NUM = 1
EXPERT_UNITS = (32, 16)
GATE_UNITS = (8,)
TOWER_UNITS = (8,)
BN_EPS = 1e-5
BATCH = 8

INPUT_DIM = EMB_DIM * (len(CAT_FEATURES) + len(VAR_FEATURES)) + len(CON_FEATURES)  # 34

# ---------------- fused-layout constants ----------------
LANE = 128
H0, H1 = EXPERT_UNITS               # expert hidden widths (32, 16)
GH = GATE_UNITS[-1]                 # gate hidden width (8)
TH = TOWER_UNITS[-1]                # tower hidden width (8)
E_TOT = NUM_TASKS * SPECIFIC_EXPERT_NUM + SHARED_EXPERT_NUM   # 3 experts per level
EXP_L0_W = E_TOT * H0               # 96  : expert layer-0 hidden block in stage-A output
GATE_H_OFF = EXP_L0_W               # 96  : gate hidden block starts here in stage-A output
EXP_OUT_W = E_TOT * H1              # 48  : expert outputs block in stage-B output
SPEC_GATE_DIM = SPECIFIC_EXPERT_NUM + SHARED_EXPERT_NUM                 # 2
SHARED_GATE_DIM = NUM_TASKS * SPECIFIC_EXPERT_NUM + SHARED_EXPERT_NUM   # 3
NUM_W_SLOTS = 2 * NUM_LEVELS + 2    # per level: [stage A, stage B]; then tower, tower-final
NUM_B_ROWS = ((2 * NUM_LEVELS + 1 + 7) // 8) * 8

# (column offset in stage-B output, width) for each gate's logits: task 0..N-1, then shared
GATE_SLOTS = []
_o = EXP_OUT_W
for _t in range(NUM_TASKS):
    GATE_SLOTS.append((_o, SPEC_GATE_DIM))
    _o += SPEC_GATE_DIM
GATE_SLOTS.append((_o, SHARED_GATE_DIM))
BC_WIDTH = _o + SHARED_GATE_DIM     # 55


# ---------------- pure-JAX reference (unfused, original parameter structure) ----------------
def _dnn(x, layers, read):
    """deepctr-style DNN layer: Linear -> BatchNorm(inference) -> ReLU (dropout=0)."""
    h = x
    for lyr in layers:
        h = jnp.dot(h, read(lyr["W"]), preferred_element_type=jnp.float32) + read(lyr["b"])
        bn = read(lyr["bn"])  # rows: [gamma, beta, running_mean, running_var]
        gamma, beta, rm, rv = bn[0:1, :], bn[1:2, :], bn[2:3, :], bn[3:4, :]
        h = (h - rm) * jax.lax.rsqrt(rv + BN_EPS) * gamma + beta
        h = jnp.maximum(h, 0.0)
    return h


def _softmax(z):
    z = z - jnp.max(z, axis=-1, keepdims=True)
    e = jnp.exp(z)
    return e / jnp.sum(e, axis=-1, keepdims=True)


def _mix_ref(gate_w, experts):
    return sum(gate_w[:, e: e + 1] * experts[e] for e in range(len(experts)))


def ple_forward(dnn_input, P, read):
    inputs = [dnn_input] * (NUM_TASKS + 1)
    for level in range(NUM_LEVELS):
        spec_outs = []
        for i in range(NUM_TASKS):
            for j in range(SPECIFIC_EXPERT_NUM):
                spec_outs.append(_dnn(inputs[i], P["specific_experts"][level][i][j], read))
        shared_outs = []
        for k in range(SHARED_EXPERT_NUM):
            shared_outs.append(_dnn(inputs[-1], P["shared_experts"][level][0][k], read))
        outs = []
        for i in range(NUM_TASKS):
            cur = spec_outs[i * SPECIFIC_EXPERT_NUM: (i + 1) * SPECIFIC_EXPERT_NUM] + shared_outs
            g = _dnn(inputs[i], P["specific_gate_dnn"][level][i][0], read)
            g = jnp.dot(g, read(P["specific_gate_final"][level][i]),
                        preferred_element_type=jnp.float32)
            outs.append(_mix_ref(_softmax(g), cur))
        cur = spec_outs + shared_outs
        g = _dnn(inputs[-1], P["shared_gate_dnn"][level], read)
        g = jnp.dot(g, read(P["shared_gate_final"][level]),
                    preferred_element_type=jnp.float32)
        outs.append(_mix_ref(_softmax(g), cur))
        inputs = outs
    task_outs = []
    for i in range(NUM_TASKS):
        t = _dnn(inputs[i], P["tower_dnn"][i], read)
        logit = jnp.dot(t, read(P["tower_final"][i]), preferred_element_type=jnp.float32)
        task_outs.append(jax.nn.sigmoid(logit))
    return jnp.concatenate(task_outs, axis=-1)  # (B, NUM_TASKS)


# ---------------- Pallas kernel (fused, BN-folded, slab-packed weights) ----------------
def ple_kernel(x_ref, w_ref, b_ref, o_ref):
    B = x_ref.shape[0]

    def softmax(z):
        z = z - jnp.max(z, axis=-1, keepdims=True)
        e = jnp.exp(z)
        return e / jnp.sum(e, axis=-1, keepdims=True)

    def mix(gate, experts, sel):
        # gate: (B, len(sel)); experts: (B, EXP_OUT_W) with expert e at lanes [e*H1, (e+1)*H1)
        out = gate[:, 0:1] * experts[:, sel[0] * H1:(sel[0] + 1) * H1]
        for k in range(1, len(sel)):
            e = sel[k]
            out = out + gate[:, k:k + 1] * experts[:, e * H1:(e + 1) * H1]
        return out

    def cgc_level(y, lvl):
        wa = w_ref[2 * lvl]                      # (128,128): all expert L0 + all gate DNNs
        wbc = w_ref[2 * lvl + 1]                 # (128,128): block-diag expert L1 + gate finals
        ba = b_ref[2 * lvl:2 * lvl + 1, :]       # (1,128) folded biases
        bbc = b_ref[2 * lvl + 1:2 * lvl + 2, :]  # (1,128) folded biases (zero on gate-final cols)
        # stage A: one matmul for every expert layer-0 and every gate DNN (BN folded in)
        a = jnp.maximum(jnp.dot(y, wa, preferred_element_type=jnp.float32) + ba, 0.0)
        # stage B: one matmul for every expert layer-1 and every gate final layer
        c = jnp.dot(a, wbc, preferred_element_type=jnp.float32) + bbc
        experts = jnp.maximum(c[:, :EXP_OUT_W], 0.0)
        outs = []
        for t in range(NUM_TASKS):
            off, dim = GATE_SLOTS[t]
            gate = softmax(c[:, off:off + dim])
            sel = (list(range(t * SPECIFIC_EXPERT_NUM, (t + 1) * SPECIFIC_EXPERT_NUM))
                   + list(range(NUM_TASKS * SPECIFIC_EXPERT_NUM, E_TOT)))
            outs.append(mix(gate, experts, sel))
        off, dim = GATE_SLOTS[NUM_TASKS]
        gate = softmax(c[:, off:off + dim])
        outs.append(mix(gate, experts, list(range(E_TOT))))
        pad = jnp.zeros((B, LANE - (NUM_TASKS + 1) * H1), jnp.float32)
        return jnp.concatenate(outs + [pad], axis=1)   # lane-dense (B, 128)

    y = x_ref[...]                               # (B, 128), zeros beyond INPUT_DIM
    for lvl in range(NUM_LEVELS):
        y = cgc_level(y, lvl)
    # towers (both tasks fused, block-diagonal) + fused tower-final logits + sigmoid
    bt = b_ref[2 * NUM_LEVELS:2 * NUM_LEVELS + 1, :]
    t = jnp.maximum(
        jnp.dot(y, w_ref[2 * NUM_LEVELS], preferred_element_type=jnp.float32) + bt, 0.0)
    logits = jnp.dot(t, w_ref[2 * NUM_LEVELS + 1], preferred_element_type=jnp.float32)
    o_ref[...] = jax.nn.sigmoid(logits)          # cols >= NUM_TASKS are 0.5 junk, sliced off outside


def ple_pallas(dnn_input, w_slab, b_slab):
    B = dnn_input.shape[0]
    assert B % 8 == 0, "batch must be a multiple of 8 (sublane tile)"
    x_pad = jnp.zeros((B, LANE), jnp.float32).at[:, :INPUT_DIM].set(dnn_input)
    bt = min(B, 256)
    while B % bt:
        bt //= 2
    grid = (B // bt,)
    out = pl.pallas_call(
        ple_kernel,
        out_shape=jax.ShapeDtypeStruct((B, LANE), jnp.float32),
        grid=grid,
        in_specs=[
            pl.BlockSpec((bt, LANE), lambda i: (i, 0)),
            pl.BlockSpec((NUM_W_SLOTS, LANE, LANE), lambda i: (0, 0, 0)),
            pl.BlockSpec((NUM_B_ROWS, LANE), lambda i: (0, 0)),
        ],
        out_specs=pl.BlockSpec((bt, LANE), lambda i: (i, 0)),
        compiler_params=pltpu.CompilerParams(dimension_semantics=("parallel",)),
    )(x_pad, w_slab, b_slab)
    return out[:, :NUM_TASKS]


# ---------------- host-side packing: fold BN, fuse/block-diag into lane-dense slabs ----------------
def _fold_bn(layer):
    W = np.asarray(layer["W"], np.float32)
    b = np.asarray(layer["b"], np.float32)[0]
    bn = np.asarray(layer["bn"], np.float32)
    gamma, beta, rm, rv = bn[0], bn[1], bn[2], bn[3]
    scale = gamma / np.sqrt(rv + BN_EPS)
    return W * scale[None, :], (b - rm) * scale + beta


def pack_params(P):
    # Fusion layout assumes the configured depths (2 expert layers, 1 gate layer, 1 tower layer).
    assert len(EXPERT_UNITS) == 2 and len(GATE_UNITS) == 1 and len(TOWER_UNITS) == 1
    W = np.zeros((NUM_W_SLOTS, LANE, LANE), np.float32)
    Bv = np.zeros((NUM_B_ROWS, LANE), np.float32)

    def owner_rows(level, owner):
        # rows of the stage-A input consumed by `owner` (task id, or NUM_TASKS == shared)
        if level == 0:
            return 0, INPUT_DIM
        return owner * H1, owner * H1 + H1

    for lvl in range(NUM_LEVELS):
        wa, wbc = 2 * lvl, 2 * lvl + 1
        # experts in global order: task-specific (task-major), then shared
        experts = []
        for i in range(NUM_TASKS):
            for j in range(SPECIFIC_EXPERT_NUM):
                experts.append((i, P["specific_experts"][lvl][i][j]))
        for k in range(SHARED_EXPERT_NUM):
            experts.append((NUM_TASKS, P["shared_experts"][lvl][0][k]))
        for e, (owner, layers) in enumerate(experts):
            w0, b0 = _fold_bn(layers[0])
            r0, r1 = owner_rows(lvl, owner)
            c0 = e * H0
            W[wa, r0:r1, c0:c0 + H0] = w0
            Bv[wa, c0:c0 + H0] = b0
            w1, b1 = _fold_bn(layers[1])
            W[wbc, e * H0:(e + 1) * H0, e * H1:(e + 1) * H1] = w1
            Bv[wbc, e * H1:(e + 1) * H1] = b1
        # gates: specific gates (one per task), then the shared gate
        gates = [(i, P["specific_gate_dnn"][lvl][i][0], P["specific_gate_final"][lvl][i])
                 for i in range(NUM_TASKS)]
        gates.append((NUM_TASKS, P["shared_gate_dnn"][lvl], P["shared_gate_final"][lvl]))
        for g, (owner, gate_layers, gate_final) in enumerate(gates):
            wg, bg = _fold_bn(gate_layers[0])
            r0, r1 = owner_rows(lvl, owner)
            c0 = GATE_H_OFF + g * GH
            W[wa, r0:r1, c0:c0 + GH] = wg
            Bv[wa, c0:c0 + GH] = bg
            off, dim = GATE_SLOTS[g]
            W[wbc, c0:c0 + GH, off:off + dim] = np.asarray(gate_final, np.float32)
            # gate final layers have no bias (nn.Linear(bias=False)); bias cols stay 0
    wt, wf = 2 * NUM_LEVELS, 2 * NUM_LEVELS + 1
    for i in range(NUM_TASKS):
        tw, tb = _fold_bn(P["tower_dnn"][i][0])
        W[wt, i * H1:(i + 1) * H1, i * TH:(i + 1) * TH] = tw
        Bv[wt, i * TH:(i + 1) * TH] = tb
        W[wf, i * TH:(i + 1) * TH, i] = np.asarray(P["tower_final"][i], np.float32)[:, 0]
    return jnp.asarray(W), jnp.asarray(Bv)


# ---------------- deterministic parameter construction ----------------
def init_params(key):
    keys = iter(jax.random.split(key, 512))

    def nk():
        return next(keys)

    def linear(d_in, d_out, std=0.05):
        return jax.random.normal(nk(), (d_in, d_out), jnp.float32) * std

    def dnn(d_in, units):
        layers, d = [], d_in
        for u in units:
            gamma = 1.0 + 0.1 * jax.random.normal(nk(), (1, u), jnp.float32)
            beta = 0.1 * jax.random.normal(nk(), (1, u), jnp.float32)
            rm = 0.1 * jax.random.normal(nk(), (1, u), jnp.float32)
            rv = jax.random.uniform(nk(), (1, u), jnp.float32, 0.5, 1.5)
            layers.append(
                {
                    "W": linear(d, u),
                    "b": 0.1 * jax.random.normal(nk(), (1, u), jnp.float32),
                    "bn": jnp.concatenate([gamma, beta, rm, rv], axis=0).astype(jnp.float32),
                }
            )
            d = u
        return layers

    exp_out = EXPERT_UNITS[-1]
    gate_out = GATE_UNITS[-1]

    def level_in(level):
        return INPUT_DIM if level == 0 else exp_out

    P = {}
    P["specific_experts"] = [
        [[dnn(level_in(l), EXPERT_UNITS) for _ in range(SPECIFIC_EXPERT_NUM)] for _ in range(NUM_TASKS)]
        for l in range(NUM_LEVELS)
    ]
    P["shared_experts"] = [
        [[dnn(level_in(l), EXPERT_UNITS) for _ in range(SHARED_EXPERT_NUM)] for _ in range(1)]
        for l in range(NUM_LEVELS)
    ]
    P["specific_gate_dnn"] = [
        [[dnn(level_in(l), GATE_UNITS)] for _ in range(NUM_TASKS)] for l in range(NUM_LEVELS)
    ]
    P["specific_gate_final"] = [
        [linear(gate_out, SPECIFIC_EXPERT_NUM + SHARED_EXPERT_NUM) for _ in range(NUM_TASKS)]
        for _ in range(NUM_LEVELS)
    ]
    P["shared_gate_dnn"] = [dnn(level_in(l), GATE_UNITS) for l in range(NUM_LEVELS)]
    P["shared_gate_final"] = [
        linear(gate_out, NUM_TASKS * SPECIFIC_EXPERT_NUM + SHARED_EXPERT_NUM) for _ in range(NUM_LEVELS)
    ]
    P["tower_dnn"] = [dnn(exp_out, TOWER_UNITS) for _ in range(NUM_TASKS)]
    P["tower_final"] = [linear(TOWER_UNITS[-1], 1) for _ in range(NUM_TASKS)]
    return P


def init_embeddings(key):
    tables = {}
    for i, (name, (vocab, _col)) in enumerate(CAT_FEATURES.items()):
        tables[name] = jax.random.normal(jax.random.fold_in(key, i), (vocab, EMB_DIM), jnp.float32) * 1e-4
    for j, (name, (vocab, _s, _l)) in enumerate(VAR_FEATURES.items()):
        tables[name] = (
            jax.random.normal(jax.random.fold_in(key, 100 + j), (vocab, EMB_DIM), jnp.float32) * 1e-4
        )
    return tables


# ---------------- input glue (embedding lookups stay in plain JAX) ----------------
def build_dnn_input(x, emb_tables):
    cat_list = []
    for name, (_vocab, col) in CAT_FEATURES.items():
        idx = x[:, col].astype(jnp.int32)
        cat_list.append(emb_tables[name][idx])  # (B, EMB_DIM)
    con_list = [x[:, col][:, None] for _name, col in CON_FEATURES.items()]
    var_list = []
    for name, (_vocab, start, max_len) in VAR_FEATURES.items():
        seq = x[:, start: start + max_len].astype(jnp.int32)
        emb = emb_tables[name][seq]  # (B, L, EMB_DIM)
        # TODO(synk): varlen_embedding_lookup / get_varlen_pooling_list sources not provided;
        # approximated here as mean pooling over the full sequence.
        var_list.append(jnp.mean(emb, axis=1))
    return jnp.concatenate(cat_list + con_list + var_list, axis=1).astype(jnp.float32)


if __name__ == "__main__":
    key = jax.random.PRNGKey(0)
    kc, kn, kv, kp, ke = jax.random.split(key, 5)

    # build raw input x: 3 categorical cols, 2 continuous cols, 1 varlen seq of length 4
    cat_cols = jnp.stack(
        [
            jax.random.randint(jax.random.fold_in(kc, i), (BATCH,), 0, vocab)
            for i, (_name, (vocab, _col)) in enumerate(CAT_FEATURES.items())
        ],
        axis=1,
    ).astype(jnp.float32)
    con_cols = jax.random.normal(kn, (BATCH, len(CON_FEATURES)), jnp.float32)
    var_cols = jax.random.randint(kv, (BATCH, 4), 0, 15).astype(jnp.float32)
    x = jnp.concatenate([cat_cols, con_cols, var_cols], axis=1)  # (8, 9)

    emb_tables = init_embeddings(ke)
    params = init_params(kp)
    w_slab, b_slab = pack_params(params)          # (6,128,128), (8,128) lane-dense slabs

    dnn_input = build_dnn_input(x, emb_tables)    # (8, 34)
    out = ple_pallas(dnn_input, w_slab, b_slab)
    out = jax.block_until_ready(out)

    # pure-JAX reference of the same forward pass (unfused BN, unpacked params)
    ref = ple_forward(dnn_input, params, lambda a: a)
    assert out.shape == (BATCH, NUM_TASKS), out.shape
    assert jnp.allclose(out, ref, atol=5e-5, rtol=5e-5), (out, ref)

    print("KERNEL_OK")
</pallas_src>

<mosaic_0001>
module attributes {stable_mosaic.version = 11 : i64} {
  func.func @ple_kernel(%arg0: i32, %arg1: memref<8x128xf32, #tpu.memory_space<vmem>>, %arg2: memref<6x128x128xf32, #tpu.memory_space<vmem>>, %arg3: memref<8x128xf32, #tpu.memory_space<vmem>>, %arg4: memref<8x128xf32, #tpu.memory_space<vmem>>) attributes {dimension_semantics = [#tpu.dimension_semantics<parallel>], iteration_bounds = array<i64: 1>, scalar_prefetch = 0 : i64, scratch_operands = 0 : i64, tpu.core_type = #tpu.core_type<tc>, window_params = [{transform_indices = @transform_0, window_bounds = array<i64: 8, 128>}, {pipeline_mode = #tpu.pipeline_mode<synchronous>, transform_indices = @transform_1, window_bounds = array<i64: 6, 128, 128>}, {pipeline_mode = #tpu.pipeline_mode<synchronous>, transform_indices = @transform_2, window_bounds = array<i64: 8, 128>}, {transform_indices = @transform_3, window_bounds = array<i64: 8, 128>}]} {
    %c0 = arith.constant 0 : index
    %c0_0 = arith.constant 0 : index
    %0 = vector.load %arg1[%c0, %c0_0] : memref<8x128xf32, #tpu.memory_space<vmem>>, vector<8x128xf32>
    %c0_1 = arith.constant 0 : index
    %c0_2 = arith.constant 0 : index
    %c0_3 = arith.constant 0 : index
    %1 = vector.load %arg2[%c0_1, %c0_2, %c0_3] : memref<6x128x128xf32, #tpu.memory_space<vmem>>, vector<1x128x128xf32>
    %2 = vector.shape_cast %1 : vector<1x128x128xf32> to vector<128x128xf32>
    %c1 = arith.constant 1 : index
    %c0_4 = arith.constant 0 : index
    %c0_5 = arith.constant 0 : index
    %3 = vector.load %arg2[%c1, %c0_4, %c0_5] : memref<6x128x128xf32, #tpu.memory_space<vmem>>, vector<1x128x128xf32>
    %4 = vector.shape_cast %3 : vector<1x128x128xf32> to vector<128x128xf32>
    %c0_6 = arith.constant 0 : index
    %c0_7 = arith.constant 0 : index
    %5 = vector.load %arg3[%c0_6, %c0_7] : memref<8x128xf32, #tpu.memory_space<vmem>>, vector<1x128xf32>
    %c1_8 = arith.constant 1 : index
    %c0_9 = arith.constant 0 : index
    %6 = vector.load %arg3[%c1_8, %c0_9] : memref<8x128xf32, #tpu.memory_space<vmem>>, vector<1x128xf32>
    %cst = arith.constant dense<0.000000e+00> : vector<8x128xf32>
    %7 = tpu.matmul %0, %2, %cst {dimension_numbers = #tpu.dot_dimension_numbers<[1], [0], [0], [1], [0, 0, 1, 1], [], []>} : vector<8x128xf32>, vector<128x128xf32>, vector<8x128xf32> -> vector<8x128xf32>
    %8 = vector.broadcast %5 : vector<1x128xf32> to vector<8x128xf32>
    %9 = arith.addf %7, %8 : vector<8x128xf32>
    %cst_10 = arith.constant 0.000000e+00 : f32
    %10 = vector.broadcast %cst_10 : f32 to vector<8x128xf32>
    %11 = arith.maximumf %9, %10 : vector<8x128xf32>
    %cst_11 = arith.constant dense<0.000000e+00> : vector<8x128xf32>
    %12 = tpu.matmul %11, %4, %cst_11 {dimension_numbers = #tpu.dot_dimension_numbers<[1], [0], [0], [1], [0, 0, 1, 1], [], []>} : vector<8x128xf32>, vector<128x128xf32>, vector<8x128xf32> -> vector<8x128xf32>
    %13 = vector.broadcast %6 : vector<1x128xf32> to vector<8x128xf32>
    %14 = arith.addf %12, %13 : vector<8x128xf32>
    %15 = vector.extract_strided_slice %14 {offsets = [0, 0], sizes = [8, 48], strides = [1, 1]} : vector<8x128xf32> to vector<8x48xf32>
    %cst_12 = arith.constant 0.000000e+00 : f32
    %16 = vector.broadcast %cst_12 : f32 to vector<8x48xf32>
    %17 = arith.maximumf %15, %16 : vector<8x48xf32>
    %18 = vector.extract_strided_slice %14 {offsets = [0, 48], sizes = [8, 2], strides = [1, 1]} : vector<8x128xf32> to vector<8x2xf32>
    %cst_13 = arith.constant dense<0xFF800000> : vector<8xf32>
    %19 = vector.multi_reduction <maximumf>, %18, %cst_13 [1] : vector<8x2xf32> to vector<8xf32>
    %20 = vector.shape_cast %19 : vector<8xf32> to vector<8x1xf32>
    %21 = vector.broadcast %20 : vector<8x1xf32> to vector<8x2xf32>
    %22 = arith.subf %18, %21 : vector<8x2xf32>
    %23 = math.exp %22 : vector<8x2xf32>
    %cst_14 = arith.constant dense<0.000000e+00> : vector<8xf32>
    %24 = vector.multi_reduction <add>, %23, %cst_14 [1] : vector<8x2xf32> to vector<8xf32>
    %25 = vector.shape_cast %24 : vector<8xf32> to vector<8x1xf32>
    %26 = vector.broadcast %25 : vector<8x1xf32> to vector<8x2xf32>
    %27 = arith.divf %23, %26 : vector<8x2xf32>
    %28 = vector.extract_strided_slice %27 {offsets = [0, 0], sizes = [8, 1], strides = [1, 1]} : vector<8x2xf32> to vector<8x1xf32>
    %29 = vector.extract_strided_slice %17 {offsets = [0, 0], sizes = [8, 16], strides = [1, 1]} : vector<8x48xf32> to vector<8x16xf32>
    %30 = vector.broadcast %28 : vector<8x1xf32> to vector<8x16xf32>
    %31 = arith.mulf %30, %29 : vector<8x16xf32>
    %32 = vector.extract_strided_slice %27 {offsets = [0, 1], sizes = [8, 1], strides = [1, 1]} : vector<8x2xf32> to vector<8x1xf32>
    %33 = vector.extract_strided_slice %17 {offsets = [0, 32], sizes = [8, 16], strides = [1, 1]} : vector<8x48xf32> to vector<8x16xf32>
    %34 = vector.broadcast %32 : vector<8x1xf32> to vector<8x16xf32>
    %35 = arith.mulf %34, %33 : vector<8x16xf32>
    %36 = arith.addf %31, %35 : vector<8x16xf32>
    %37 = vector.extract_strided_slice %14 {offsets = [0, 50], sizes = [8, 2], strides = [1, 1]} : vector<8x128xf32> to vector<8x2xf32>
    %cst_15 = arith.constant dense<0xFF800000> : vector<8xf32>
    %38 = vector.multi_reduction <maximumf>, %37, %cst_15 [1] : vector<8x2xf32> to vector<8xf32>
    %39 = vector.shape_cast %38 : vector<8xf32> to vector<8x1xf32>
    %40 = vector.broadcast %39 : vector<8x1xf32> to vector<8x2xf32>
    %41 = arith.subf %37, %40 : vector<8x2xf32>
    %42 = math.exp %41 : vector<8x2xf32>
    %cst_16 = arith.constant dense<0.000000e+00> : vector<8xf32>
    %43 = vector.multi_reduction <add>, %42, %cst_16 [1] : vector<8x2xf32> to vector<8xf32>
    %44 = vector.shape_cast %43 : vector<8xf32> to vector<8x1xf32>
    %45 = vector.broadcast %44 : vector<8x1xf32> to vector<8x2xf32>
    %46 = arith.divf %42, %45 : vector<8x2xf32>
    %47 = vector.extract_strided_slice %46 {offsets = [0, 0], sizes = [8, 1], strides = [1, 1]} : vector<8x2xf32> to vector<8x1xf32>
    %48 = vector.extract_strided_slice %17 {offsets = [0, 16], sizes = [8, 16], strides = [1, 1]} : vector<8x48xf32> to vector<8x16xf32>
    %49 = vector.broadcast %47 : vector<8x1xf32> to vector<8x16xf32>
    %50 = arith.mulf %49, %48 : vector<8x16xf32>
    %51 = vector.extract_strided_slice %46 {offsets = [0, 1], sizes = [8, 1], strides = [1, 1]} : vector<8x2xf32> to vector<8x1xf32>
    %52 = vector.extract_strided_slice %17 {offsets = [0, 32], sizes = [8, 16], strides = [1, 1]} : vector<8x48xf32> to vector<8x16xf32>
    %53 = vector.broadcast %51 : vector<8x1xf32> to vector<8x16xf32>
    %54 = arith.mulf %53, %52 : vector<8x16xf32>
    %55 = arith.addf %50, %54 : vector<8x16xf32>
    %56 = vector.extract_strided_slice %14 {offsets = [0, 52], sizes = [8, 3], strides = [1, 1]} : vector<8x128xf32> to vector<8x3xf32>
    %cst_17 = arith.constant dense<0xFF800000> : vector<8xf32>
    %57 = vector.multi_reduction <maximumf>, %56, %cst_17 [1] : vector<8x3xf32> to vector<8xf32>
    %58 = vector.shape_cast %57 : vector<8xf32> to vector<8x1xf32>
    %59 = vector.broadcast %58 : vector<8x1xf32> to vector<8x3xf32>
    %60 = arith.subf %56, %59 : vector<8x3xf32>
    %61 = math.exp %60 : vector<8x3xf32>
    %cst_18 = arith.constant dense<0.000000e+00> : vector<8xf32>
    %62 = vector.multi_reduction <add>, %61, %cst_18 [1] : vector<8x3xf32> to vector<8xf32>
    %63 = vector.shape_cast %62 : vector<8xf32> to vector<8x1xf32>
    %64 = vector.broadcast %63 : vector<8x1xf32> to vector<8x3xf32>
    %65 = arith.divf %61, %64 : vector<8x3xf32>
    %66 = vector.extract_strided_slice %65 {offsets = [0, 0], sizes = [8, 1], strides = [1, 1]} : vector<8x3xf32> to vector<8x1xf32>
    %67 = vector.extract_strided_slice %17 {offsets = [0, 0], sizes = [8, 16], strides = [1, 1]} : vector<8x48xf32> to vector<8x16xf32>
    %68 = vector.broadcast %66 : vector<8x1xf32> to vector<8x16xf32>
    %69 = arith.mulf %68, %67 : vector<8x16xf32>
    %70 = vector.extract_strided_slice %65 {offsets = [0, 1], sizes = [8, 1], strides = [1, 1]} : vector<8x3xf32> to vector<8x1xf32>
    %71 = vector.extract_strided_slice %17 {offsets = [0, 16], sizes = [8, 16], strides = [1, 1]} : vector<8x48xf32> to vector<8x16xf32>
    %72 = vector.broadcast %70 : vector<8x1xf32> to vector<8x16xf32>
    %73 = arith.mulf %72, %71 : vector<8x16xf32>
    %74 = arith.addf %69, %73 : vector<8x16xf32>
    %75 = vector.extract_strided_slice %65 {offsets = [0, 2], sizes = [8, 1], strides = [1, 1]} : vector<8x3xf32> to vector<8x1xf32>
    %76 = vector.extract_strided_slice %17 {offsets = [0, 32], sizes = [8, 16], strides = [1, 1]} : vector<8x48xf32> to vector<8x16xf32>
    %77 = vector.broadcast %75 : vector<8x1xf32> to vector<8x16xf32>
    %78 = arith.mulf %77, %76 : vector<8x16xf32>
    %79 = arith.addf %74, %78 : vector<8x16xf32>
    %cst_19 = arith.constant 0.000000e+00 : f32
    %80 = vector.broadcast %cst_19 : f32 to vector<8x80xf32>
    %81 = tpu.concatenate %36, %55, %79, %80 in 1 : vector<8x16xf32>, vector<8x16xf32>, vector<8x16xf32>, vector<8x80xf32> -> vector<8x128xf32>
    %c2 = arith.constant 2 : index
    %c0_20 = arith.constant 0 : index
    %c0_21 = arith.constant 0 : index
    %82 = vector.load %arg2[%c2, %c0_20, %c0_21] : memref<6x128x128xf32, #tpu.memory_space<vmem>>, vector<1x128x128xf32>
    %83 = vector.shape_cast %82 : vector<1x128x128xf32> to vector<128x128xf32>
    %c3 = arith.constant 3 : index
    %c0_22 = arith.constant 0 : index
    %c0_23 = arith.constant 0 : index
    %84 = vector.load %arg2[%c3, %c0_22, %c0_23] : memref<6x128x128xf32, #tpu.memory_space<vmem>>, vector<1x128x128xf32>
    %85 = vector.shape_cast %84 : vector<1x128x128xf32> to vector<128x128xf32>
    %c2_24 = arith.constant 2 : index
    %c0_25 = arith.constant 0 : index
    %86 = vector.load %arg3[%c2_24, %c0_25] : memref<8x128xf32, #tpu.memory_space<vmem>>, vector<1x128xf32>
    %c3_26 = arith.constant 3 : index
    %c0_27 = arith.constant 0 : index
    %87 = vector.load %arg3[%c3_26, %c0_27] : memref<8x128xf32, #tpu.memory_space<vmem>>, vector<1x128xf32>
    %cst_28 = arith.constant dense<0.000000e+00> : vector<8x128xf32>
    %88 = tpu.matmul %81, %83, %cst_28 {dimension_numbers = #tpu.dot_dimension_numbers<[1], [0], [0], [1], [0, 0, 1, 1], [], []>} : vector<8x128xf32>, vector<128x128xf32>, vector<8x128xf32> -> vector<8x128xf32>
    %89 = vector.broadcast %86 : vector<1x128xf32> to vector<8x128xf32>
    %90 = arith.addf %88, %89 : vector<8x128xf32>
    %cst_29 = arith.constant 0.000000e+00 : f32
    %91 = vector.broadcast %cst_29 : f32 to vector<8x128xf32>
    %92 = arith.maximumf %90, %91 : vector<8x128xf32>
    %cst_30 = arith.constant dense<0.000000e+00> : vector<8x128xf32>
    %93 = tpu.matmul %92, %85, %cst_30 {dimension_numbers = #tpu.dot_dimension_numbers<[1], [0], [0], [1], [0, 0, 1, 1], [], []>} : vector<8x128xf32>, vector<128x128xf32>, vector<8x128xf32> -> vector<8x128xf32>
    %94 = vector.broadcast %87 : vector<1x128xf32> to vector<8x128xf32>
    %95 = arith.addf %93, %94 : vector<8x128xf32>
    %96 = vector.extract_strided_slice %95 {offsets = [0, 0], sizes = [8, 48], strides = [1, 1]} : vector<8x128xf32> to vector<8x48xf32>
    %cst_31 = arith.constant 0.000000e+00 : f32
    %97 = vector.broadcast %cst_31 : f32 to vector<8x48xf32>
    %98 = arith.maximumf %96, %97 : vector<8x48xf32>
    %99 = vector.extract_strided_slice %95 {offsets = [0, 48], sizes = [8, 2], strides = [1, 1]} : vector<8x128xf32> to vector<8x2xf32>
    %cst_32 = arith.constant dense<0xFF800000> : vector<8xf32>
    %100 = vector.multi_reduction <maximumf>, %99, %cst_32 [1] : vector<8x2xf32> to vector<8xf32>
    %101 = vector.shape_cast %100 : vector<8xf32> to vector<8x1xf32>
    %102 = vector.broadcast %101 : vector<8x1xf32> to vector<8x2xf32>
    %103 = arith.subf %99, %102 : vector<8x2xf32>
    %104 = math.exp %103 : vector<8x2xf32>
    %cst_33 = arith.constant dense<0.000000e+00> : vector<8xf32>
    %105 = vector.multi_reduction <add>, %104, %cst_33 [1] : vector<8x2xf32> to vector<8xf32>
    %106 = vector.shape_cast %105 : vector<8xf32> to vector<8x1xf32>
    %107 = vector.broadcast %106 : vector<8x1xf32> to vector<8x2xf32>
    %108 = arith.divf %104, %107 : vector<8x2xf32>
    %109 = vector.extract_strided_slice %108 {offsets = [0, 0], sizes = [8, 1], strides = [1, 1]} : vector<8x2xf32> to vector<8x1xf32>
    %110 = vector.extract_strided_slice %98 {offsets = [0, 0], sizes = [8, 16], strides = [1, 1]} : vector<8x48xf32> to vector<8x16xf32>
    %111 = vector.broadcast %109 : vector<8x1xf32> to vector<8x16xf32>
    %112 = arith.mulf %111, %110 : vector<8x16xf32>
    %113 = vector.extract_strided_slice %108 {offsets = [0, 1], sizes = [8, 1], strides = [1, 1]} : vector<8x2xf32> to vector<8x1xf32>
    %114 = vector.extract_strided_slice %98 {offsets = [0, 32], sizes = [8, 16], strides = [1, 1]} : vector<8x48xf32> to vector<8x16xf32>
    %115 = vector.broadcast %113 : vector<8x1xf32> to vector<8x16xf32>
    %116 = arith.mulf %115, %114 : vector<8x16xf32>
    %117 = arith.addf %112, %116 : vector<8x16xf32>
    %118 = vector.extract_strided_slice %95 {offsets = [0, 50], sizes = [8, 2], strides = [1, 1]} : vector<8x128xf32> to vector<8x2xf32>
    %cst_34 = arith.constant dense<0xFF800000> : vector<8xf32>
    %119 = vector.multi_reduction <maximumf>, %118, %cst_34 [1] : vector<8x2xf32> to vector<8xf32>
    %120 = vector.shape_cast %119 : vector<8xf32> to vector<8x1xf32>
    %121 = vector.broadcast %120 : vector<8x1xf32> to vector<8x2xf32>
    %122 = arith.subf %118, %121 : vector<8x2xf32>
    %123 = math.exp %122 : vector<8x2xf32>
    %cst_35 = arith.constant dense<0.000000e+00> : vector<8xf32>
    %124 = vector.multi_reduction <add>, %123, %cst_35 [1] : vector<8x2xf32> to vector<8xf32>
    %125 = vector.shape_cast %124 : vector<8xf32> to vector<8x1xf32>
    %126 = vector.broadcast %125 : vector<8x1xf32> to vector<8x2xf32>
    %127 = arith.divf %123, %126 : vector<8x2xf32>
    %128 = vector.extract_strided_slice %127 {offsets = [0, 0], sizes = [8, 1], strides = [1, 1]} : vector<8x2xf32> to vector<8x1xf32>
    %129 = vector.extract_strided_slice %98 {offsets = [0, 16], sizes = [8, 16], strides = [1, 1]} : vector<8x48xf32> to vector<8x16xf32>
    %130 = vector.broadcast %128 : vector<8x1xf32> to vector<8x16xf32>
    %131 = arith.mulf %130, %129 : vector<8x16xf32>
    %132 = vector.extract_strided_slice %127 {offsets = [0, 1], sizes = [8, 1], strides = [1, 1]} : vector<8x2xf32> to vector<8x1xf32>
    %133 = vector.extract_strided_slice %98 {offsets = [0, 32], sizes = [8, 16], strides = [1, 1]} : vector<8x48xf32> to vector<8x16xf32>
    %134 = vector.broadcast %132 : vector<8x1xf32> to vector<8x16xf32>
    %135 = arith.mulf %134, %133 : vector<8x16xf32>
    %136 = arith.addf %131, %135 : vector<8x16xf32>
    %137 = vector.extract_strided_slice %95 {offsets = [0, 52], sizes = [8, 3], strides = [1, 1]} : vector<8x128xf32> to vector<8x3xf32>
    %cst_36 = arith.constant dense<0xFF800000> : vector<8xf32>
    %138 = vector.multi_reduction <maximumf>, %137, %cst_36 [1] : vector<8x3xf32> to vector<8xf32>
    %139 = vector.shape_cast %138 : vector<8xf32> to vector<8x1xf32>
    %140 = vector.broadcast %139 : vector<8x1xf32> to vector<8x3xf32>
    %141 = arith.subf %137, %140 : vector<8x3xf32>
    %142 = math.exp %141 : vector<8x3xf32>
    %cst_37 = arith.constant dense<0.000000e+00> : vector<8xf32>
    %143 = vector.multi_reduction <add>, %142, %cst_37 [1] : vector<8x3xf32> to vector<8xf32>
    %144 = vector.shape_cast %143 : vector<8xf32> to vector<8x1xf32>
    %145 = vector.broadcast %144 : vector<8x1xf32> to vector<8x3xf32>
    %146 = arith.divf %142, %145 : vector<8x3xf32>
    %147 = vector.extract_strided_slice %146 {offsets = [0, 0], sizes = [8, 1], strides = [1, 1]} : vector<8x3xf32> to vector<8x1xf32>
    %148 = vector.extract_strided_slice %98 {offsets = [0, 0], sizes = [8, 16], strides = [1, 1]} : vector<8x48xf32> to vector<8x16xf32>
    %149 = vector.broadcast %147 : vector<8x1xf32> to vector<8x16xf32>
    %150 = arith.mulf %149, %148 : vector<8x16xf32>
    %151 = vector.extract_strided_slice %146 {offsets = [0, 1], sizes = [8, 1], strides = [1, 1]} : vector<8x3xf32> to vector<8x1xf32>
    %152 = vector.extract_strided_slice %98 {offsets = [0, 16], sizes = [8, 16], strides = [1, 1]} : vector<8x48xf32> to vector<8x16xf32>
    %153 = vector.broadcast %151 : vector<8x1xf32> to vector<8x16xf32>
    %154 = arith.mulf %153, %152 : vector<8x16xf32>
    %155 = arith.addf %150, %154 : vector<8x16xf32>
    %156 = vector.extract_strided_slice %146 {offsets = [0, 2], sizes = [8, 1], strides = [1, 1]} : vector<8x3xf32> to vector<8x1xf32>
    %157 = vector.extract_strided_slice %98 {offsets = [0, 32], sizes = [8, 16], strides = [1, 1]} : vector<8x48xf32> to vector<8x16xf32>
    %158 = vector.broadcast %156 : vector<8x1xf32> to vector<8x16xf32>
    %159 = arith.mulf %158, %157 : vector<8x16xf32>
    %160 = arith.addf %155, %159 : vector<8x16xf32>
    %cst_38 = arith.constant 0.000000e+00 : f32
    %161 = vector.broadcast %cst_38 : f32 to vector<8x80xf32>
    %162 = tpu.concatenate %117, %136, %160, %161 in 1 : vector<8x16xf32>, vector<8x16xf32>, vector<8x16xf32>, vector<8x80xf32> -> vector<8x128xf32>
    %c4 = arith.constant 4 : index
    %c0_39 = arith.constant 0 : index
    %163 = vector.load %arg3[%c4, %c0_39] : memref<8x128xf32, #tpu.memory_space<vmem>>, vector<1x128xf32>
    %c4_40 = arith.constant 4 : index
    %c0_41 = arith.constant 0 : index
    %c0_42 = arith.constant 0 : index
    %164 = vector.load %arg2[%c4_40, %c0_41, %c0_42] : memref<6x128x128xf32, #tpu.memory_space<vmem>>, vector<1x128x128xf32>
    %165 = vector.shape_cast %164 : vector<1x128x128xf32> to vector<128x128xf32>
    %cst_43 = arith.constant dense<0.000000e+00> : vector<8x128xf32>
    %166 = tpu.matmul %162, %165, %cst_43 {dimension_numbers = #tpu.dot_dimension_numbers<[1], [0], [0], [1], [0, 0, 1, 1], [], []>} : vector<8x128xf32>, vector<128x128xf32>, vector<8x128xf32> -> vector<8x128xf32>
    %167 = vector.broadcast %163 : vector<1x128xf32> to vector<8x128xf32>
    %168 = arith.addf %166, %167 : vector<8x128xf32>
    %cst_44 = arith.constant 0.000000e+00 : f32
    %169 = vector.broadcast %cst_44 : f32 to vector<8x128xf32>
    %170 = arith.maximumf %168, %169 : vector<8x128xf32>
    %c5 = arith.constant 5 : index
    %c0_45 = arith.constant 0 : index
    %c0_46 = arith.constant 0 : index
    %171 = vector.load %arg2[%c5, %c0_45, %c0_46] : memref<6x128x128xf32, #tpu.memory_space<vmem>>, vector<1x128x128xf32>
    %172 = vector.shape_cast %171 : vector<1x128x128xf32> to vector<128x128xf32>
    %cst_47 = arith.constant dense<0.000000e+00> : vector<8x128xf32>
    %173 = tpu.matmul %170, %172, %cst_47 {dimension_numbers = #tpu.dot_dimension_numbers<[1], [0], [0], [1], [0, 0, 1, 1], [], []>} : vector<8x128xf32>, vector<128x128xf32>, vector<8x128xf32> -> vector<8x128xf32>
    %174 = arith.negf %173 : vector<8x128xf32>
    %175 = math.exp %174 : vector<8x128xf32>
    %cst_48 = arith.constant 1.000000e+00 : f32
    %176 = vector.broadcast %cst_48 : f32 to vector<8x128xf32>
    %177 = arith.addf %176, %175 : vector<8x128xf32>
    %178 = arith.divf %176, %177 : vector<8x128xf32>
    %c0_49 = arith.constant 0 : index
    %c0_50 = arith.constant 0 : index
    %179 = vector.load %arg4[%c0_49, %c0_50] : memref<8x128xf32, #tpu.memory_space<vmem>>, vector<8x128xf32>
    tpu.vector_store %arg4[%c0_49, %c0_50], %178 {strides = array<i32>} : memref<8x128xf32, #tpu.memory_space<vmem>>, vector<8x128xf32>,
    return
  }
  func.func @transform_0(%arg0: i32) -> (i32, i32) {
    %c0_i32 = arith.constant 0 : i32
    %c0_i32_0 = arith.constant 0 : i32
    return %arg0, %c0_i32 : i32, i32
  }
  func.func @transform_1(%arg0: i32) -> (i32, i32, i32) {
    %c0_i32 = arith.constant 0 : i32
    %c0_i32_0 = arith.constant 0 : i32
    %c0_i32_1 = arith.constant 0 : i32
    %c0_i32_2 = arith.constant 0 : i32
    return %c0_i32, %c0_i32_0, %c0_i32_1 : i32, i32, i32
  }
  func.func @transform_2(%arg0: i32) -> (i32, i32) {
    %c0_i32 = arith.constant 0 : i32
    %c0_i32_0 = arith.constant 0 : i32
    %c0_i32_1 = arith.constant 0 : i32
    return %c0_i32, %c0_i32_0 : i32, i32
  }
  func.func @transform_3(%arg0: i32) -> (i32, i32) {
    %c0_i32 = arith.constant 0 : i32
    %c0_i32_0 = arith.constant 0 : i32
    return %arg0, %c0_i32 : i32, i32
  }
}

</mosaic_0001>

<llo_original>
// kernel: tpu_custom_call.1
$region0: #{tpu_custom_call.1}
  #allocation0 [shape = 'u32[]', space=smem, size = 0x4, offset = 0x4, fixed_abs, tag = 'smem constant byte address 0x4 - core index']
  #allocation1 [shape = 'u32[144,128]{1,0:T(1,128)}', space=vmem, size = 0x12000, scoped, tag = 'internal scratch']
  %s0 = inlined_call_operand.hbm [shape: f32[8,128], index: 0, kind: input, shape index: {}]
  %s1 = inlined_call_operand.hbm [shape: f32[6,128,128], index: 1, kind: input, shape index: {}]
  %s2 = inlined_call_operand.hbm [shape: f32[8,128], index: 2, kind: input, shape index: {}]
  %s3 = inlined_call_operand.hbm [shape: f32[8,128], index: 3, kind: output, shape index: {}]
  %s4 = sld [smem:[#allocation0]]
  $region34: #{tpu_custom_call.1} parent=0
    _
  %s6 = ssub.s32 1, %s4
  %s7 = scalar_select 0, %s6, %s4
  $region1: #{tpu_custom_call.1} parent=0
    #allocation2 [shape = 'u8[4096]{0}', space=vmem, size = 0x1000, scoped, tag = 'input window, operand 0, single buffered']
    #allocation3 [shape = 's32[1]{0}', space=sflag, size = 0x4, scoped, tag = 'scoped memory for tpu_custom_call.1']
    #allocation4 [shape = 's32[1]{0}', space=sflag, size = 0x4, scoped, tag = 'scoped memory for tpu_custom_call.1']
    #allocation5 [shape = 'u8[393216]{0}', space=vmem, size = 0x60000, scoped, tag = 'input window, operand 1, single buffered']
    #allocation6 [shape = 's32[1]{0}', space=sflag, size = 0x4, scoped, tag = 'scoped memory for tpu_custom_call.1']
    #allocation7 [shape = 'u8[4096]{0}', space=vmem, size = 0x1000, scoped, tag = 'input window, operand 2, single buffered']
    #allocation8 [shape = 'u8[4096]{0}', space=vmem, size = 0x1000, scoped, tag = 'output window, operand 0, single buffered']
    %8 = vsyncpa [#allocation3], 0
    %9 = vsyncpa [#allocation6], 0
    %10 = vsyncpa [#allocation4], 0
    // Predicated region
    $region2: #{tpu_custom_call.1} parent=1 // pred_check
      _
    $region3: #{tpu_custom_call.1} parent=1 // pred_check_branch
      %12 = sbr.rel (0) target = $region5
    $region4: #{tpu_custom_call.1} parent=1 // pred_region
      %s14 = ssub.s32 128, 128
      %15 = vsyncadd [#allocation3], %s14
      %s17 = sshll.u32 [#allocation2], 4
      %s18 = int_to_ptr.vmem [resolvable:$true] %s17
      %20 = dma.hbm_to_vmem [thread:$0]  %s0, 128, %s18, [#allocation3]
    $region5: #{tpu_custom_call.1} parent=1 // pred_fallthru
      _
    // Predicated region
    $region6: #{tpu_custom_call.1} parent=1 // pred_check
      _
    $region7: #{tpu_custom_call.1} parent=1 // pred_check_branch
      %22 = sbr.rel (0) target = $region9
    $region8: #{tpu_custom_call.1} parent=1 // pred_region
      %s24 = ssub.s32 12288, 12288
      %25 = vsyncadd [#allocation6], %s24
      %s26 = sshll.u32 [#allocation5], 4
      %s27 = int_to_ptr.vmem [resolvable:$true] %s26
      %32 = dma.hbm_to_vmem [thread:$0]  %s1, 12288, %s27, [#allocation6], 128, 128, 8
    $region9: #{tpu_custom_call.1} parent=1 // pred_fallthru
      _
    // Predicated region
    $region10: #{tpu_custom_call.1} parent=1 // pred_check
      _
    $region11: #{tpu_custom_call.1} parent=1 // pred_check_branch
      %34 = sbr.rel (0) target = $region13
    $region12: #{tpu_custom_call.1} parent=1 // pred_region
      %s36 = ssub.s32 128, 128
      %37 = vsyncadd [#allocation6], %s36
      %s39 = sshll.u32 [#allocation7], 4
      %s40 = int_to_ptr.vmem [resolvable:$true] %s39
      %42 = dma.hbm_to_vmem [thread:$0]  %s2, 128, %s40, [#allocation6]
    $region13: #{tpu_custom_call.1} parent=1 // pred_fallthru
      _
    // Predicated region
    $region14: #{tpu_custom_call.1} parent=1 // pred_check
      _
    $region15: #{tpu_custom_call.1} parent=1 // pred_check_branch
      %44 = sbr.rel (0) target = $region17
    $region16: #{tpu_custom_call.1} parent=1 // pred_region
      %45 = dma.done [#allocation3], 128
    $region17: #{tpu_custom_call.1} parent=1 // pred_fallthru
      _
    // Predicated region
    $region18: #{tpu_custom_call.1} parent=1 // pred_check
      _
    $region19: #{tpu_custom_call.1} parent=1 // pred_check_branch
      %47 = sbr.rel (0) target = $region21
    $region20: #{tpu_custom_call.1} parent=1 // pred_region
      %48 = dma.done [#allocation6], 12288
    $region21: #{tpu_custom_call.1} parent=1 // pred_fallthru
      _
    // Predicated region
    $region22: #{tpu_custom_call.1} parent=1 // pred_check
      _
    $region23: #{tpu_custom_call.1} parent=1 // pred_check_branch
      %50 = sbr.rel (0) target = $region25
    $region24: #{tpu_custom_call.1} parent=1 // pred_region
      %51 = dma.done [#allocation6], 128
    $region25: #{tpu_custom_call.1} parent=1 // pred_fallthru
      _
    %v52 = vld [vmem:[#allocation2] sm:$0xff]
    %v53 = vld [vmem:[#allocation5] sm:$0xff]
    %v54 = vld [vmem:[#allocation5 + $0x8] sm:$0xff]
    %v55 = vld [vmem:[#allocation5 + $0x10] sm:$0xff]
    %v56 = vld [vmem:[#allocation5 + $0x18] sm:$0xff]
    %v57 = vld [vmem:[#allocation5 + $0x20] sm:$0xff]
    %v58 = vld [vmem:[#allocation5 + $0x28] sm:$0xff]
    %v59 = vld [vmem:[#allocation5 + $0x30] sm:$0xff]
    %v60 = vld [vmem:[#allocation5 + $0x38] sm:$0xff]
    %v61 = vld [vmem:[#allocation5 + $0x40] sm:$0xff]
    %v62 = vld [vmem:[#allocation5 + $0x48] sm:$0xff]
    %v63 = vld [vmem:[#allocation5 + $0x50] sm:$0xff]
    %v64 = vld [vmem:[#allocation5 + $0x58] sm:$0xff]
    %v65 = vld [vmem:[#allocation5 + $0x60] sm:$0xff]
    %v66 = vld [vmem:[#allocation5 + $0x68] sm:$0xff]
    %v67 = vld [vmem:[#allocation5 + $0x70] sm:$0xff]
    %v68 = vld [vmem:[#allocation5 + $0x78] sm:$0xff]
    %s69 = scalar_lea.vmem [#allocation5], 128
    %v70 = vld [vmem:[%s69] sm:$0xff]
    %v71 = vld [vmem:[%s69 + $0x8] sm:$0xff]
    %v72 = vld [vmem:[%s69 + $0x10] sm:$0xff]
    %v73 = vld [vmem:[%s69 + $0x18] sm:$0xff]
    %v74 = vld [vmem:[%s69 + $0x20] sm:$0xff]
    %v75 = vld [vmem:[%s69 + $0x28] sm:$0xff]
    %v76 = vld [vmem:[%s69 + $0x30] sm:$0xff]
    %v77 = vld [vmem:[%s69 + $0x38] sm:$0xff]
    %v78 = vld [vmem:[%s69 + $0x40] sm:$0xff]
    %v79 = vld [vmem:[%s69 + $0x48] sm:$0xff]
    %v80 = vld [vmem:[%s69 + $0x50] sm:$0xff]
    %v81 = vld [vmem:[%s69 + $0x58] sm:$0xff]
    %v82 = vld [vmem:[%s69 + $0x60] sm:$0xff]
    %v83 = vld [vmem:[%s69 + $0x68] sm:$0xff]
    %v84 = vld [vmem:[%s69 + $0x70] sm:$0xff]
    %v85 = vld [vmem:[%s69 + $0x78] sm:$0xff]
    %v86 = vld [vmem:[#allocation7] sm:$0x1]
    %v87 = vld [vmem:[#allocation7 + $0x1] sm:$0x1]
    %v88 = vlaneseq
    %v89 = vshrl.u32 %v88, 7
    %v90 = vsub.s32 0, %v89
    %v91 = vrot.slane %v86, %v90
    %92 = vmatprep.subr.mxu0 0.0
    %93 = vmatpush1.msra.mxu0 %v53
    %94 = vmatprep.subr.mxu0 0.0
    %95 = vmatpush1.msra.mxu0 %v54
    %96 = vmatprep.subr.mxu0 0.0
    %97 = vmatpush1.msra.mxu0 %v55
    %98 = vmatprep.subr.mxu0 0.0
    %99 = vmatpush1.msra.mxu0 %v56
    %100 = vmatprep.subr.mxu0 0.0
    %101 = vmatpush1.msra.mxu0 %v57
    %102 = vmatprep.subr.mxu0 0.0
    %103 = vmatpush1.msra.mxu0 %v58
    %104 = vmatprep.subr.mxu0 0.0
    %105 = vmatpush1.msra.mxu0 %v59
    %106 = vmatprep.subr.mxu0 0.0
    %107 = vmatpush1.msra.mxu0 %v60
    %108 = vmatprep.subr.mxu0 0.0
    %109 = vmatpush1.msra.mxu0 %v61
    %110 = vmatprep.subr.mxu0 0.0
    %111 = vmatpush1.msra.mxu0 %v62
    %112 = vmatprep.subr.mxu0 0.0
    %113 = vmatpush1.msra.mxu0 %v63
    %114 = vmatprep.subr.mxu0 0.0
    %115 = vmatpush1.msra.mxu0 %v64
    %116 = vmatprep.subr.mxu0 0.0
    %117 = vmatpush1.msra.mxu0 %v65
    %118 = vmatprep.subr.mxu0 0.0
    %119 = vmatpush1.msra.mxu0 %v66
    %120 = vmatprep.subr.mxu0 0.0
    %121 = vmatpush1.msra.mxu0 %v67
    %122 = vmatprep.subr.mxu0 0.0
    %123 = vmatpush1.msra.mxu0 %v68
    %124 = vmatprep.subr.mxu0 0.0
    %125 = vmatpush1.msra.mxu0 0.0
    %126 = vmatprep.subr.mxu0 0.0
    %127 = vmatpush1.msra.mxu0 0.0
    %128 = vmatprep.subr.mxu0 0.0
    %129 = vmatpush1.msra.mxu0 0.0
    %130 = vmatprep.subr.mxu0 0.0
    %131 = vmatpush1.msra.mxu0 0.0
    %132 = vmatprep.subr.mxu0 0.0
    %133 = vmatpush1.msra.mxu0 0.0
    %134 = vmatprep.subr.mxu0 0.0
    %135 = vmatpush1.msra.mxu0 0.0
    %136 = vmatprep.subr.mxu0 0.0
    %137 = vmatpush1.msra.mxu0 0.0
    %138 = vmatprep.subr.mxu0 0.0
    %139 = vmatpush1.msra.mxu0 0.0
    %140 = vmatprep.subr.mxu0 0.0
    %141 = vmatpush1.msra.mxu0 0.0
    %142 = vmatprep.subr.mxu0 0.0
    %143 = vmatpush1.msra.mxu0 0.0
    %144 = vmatprep.subr.mxu0 0.0
    %145 = vmatpush1.msra.mxu0 0.0
    %146 = vmatprep.subr.mxu0 0.0
    %147 = vmatpush1.msra.mxu0 0.0
    %148 = vmatprep.subr.mxu0 0.0
    %149 = vmatpush1.msra.mxu0 0.0
    %150 = vmatprep.subr.mxu0 0.0
    %151 = vmatpush1.msra.mxu0 0.0
    %152 = vmatprep.subr.mxu0 0.0
    %153 = vmatpush1.msra.mxu0 0.0
    %154 = vmatprep.subr.mxu0 0.0
    %155 = vmatpush1.msra.mxu0 0.0
    %156 = vmatprep.mubr.f32.mxu0 0.0
    %157 = vmatmul.mubr.f32.gmra.mrb[0].mxu0 %v52
    %v158 = vpop.f32.mrb[0].mxu0
    %v159 = vadd.f32 %v91, %v158
    %v160 = vpop.f32.mrb[0].mxu0
    %161 = vdwg.mxu0
    %v162 = vmax.f32 %v159, 0.0
    %v163 = vlaneseq
    %v164 = vshrl.u32 %v163, 7
    %v165 = vsub.s32 0, %v164
    %v166 = vrot.slane %v87, %v165
    %167 = vmatprep.subr.mxu0 0.0
    %168 = vmatpush1.msra.mxu0 %v70
    %169 = vmatprep.subr.mxu0 0.0
    %170 = vmatpush1.msra.mxu0 %v71
    %171 = vmatprep.subr.mxu0 0.0
    %172 = vmatpush1.msra.mxu0 %v72
    %173 = vmatprep.subr.mxu0 0.0
    %174 = vmatpush1.msra.mxu0 %v73
    %175 = vmatprep.subr.mxu0 0.0
    %176 = vmatpush1.msra.mxu0 %v74
    %177 = vmatprep.subr.mxu0 0.0
    %178 = vmatpush1.msra.mxu0 %v75
    %179 = vmatprep.subr.mxu0 0.0
    %180 = vmatpush1.msra.mxu0 %v76
    %181 = vmatprep.subr.mxu0 0.0
    %182 = vmatpush1.msra.mxu0 %v77
    %183 = vmatprep.subr.mxu0 0.0
    %184 = vmatpush1.msra.mxu0 %v78
    %185 = vmatprep.subr.mxu0 0.0
    %186 = vmatpush1.msra.mxu0 %v79
    %187 = vmatprep.subr.mxu0 0.0
    %188 = vmatpush1.msra.mxu0 %v80
    %189 = vmatprep.subr.mxu0 0.0
    %190 = vmatpush1.msra.mxu0 %v81
    %191 = vmatprep.subr.mxu0 0.0
    %192 = vmatpush1.msra.mxu0 %v82
    %193 = vmatprep.subr.mxu0 0.0
    %194 = vmatpush1.msra.mxu0 %v83
    %195 = vmatprep.subr.mxu0 0.0
    %196 = vmatpush1.msra.mxu0 %v84
    %197 = vmatprep.subr.mxu0 0.0
    %198 = vmatpush1.msra.mxu0 %v85
    %199 = vmatprep.subr.mxu0 0.0
    %200 = vmatpush1.msra.mxu0 0.0
    %201 = vmatprep.subr.mxu0 0.0
    %202 = vmatpush1.msra.mxu0 0.0
    %203 = vmatprep.subr.mxu0 0.0
    %204 = vmatpush1.msra.mxu0 0.0
    %205 = vmatprep.subr.mxu0 0.0
    %206 = vmatpush1.msra.mxu0 0.0
    %207 = vmatprep.subr.mxu0 0.0
    %208 = vmatpush1.msra.mxu0 0.0
    %209 = vmatprep.subr.mxu0 0.0
    %210 = vmatpush1.msra.mxu0 0.0
    %211 = vmatprep.subr.mxu0 0.0
    %212 = vmatpush1.msra.mxu0 0.0
    %213 = vmatprep.subr.mxu0 0.0
    %214 = vmatpush1.msra.mxu0 0.0
    %215 = vmatprep.subr.mxu0 0.0
    %216 = vmatpush1.msra.mxu0 0.0
    %217 = vmatprep.subr.mxu0 0.0
    %218 = vmatpush1.msra.mxu0 0.0
    %219 = vmatprep.subr.mxu0 0.0
    %220 = vmatpush1.msra.mxu0 0.0
    %221 = vmatprep.subr.mxu0 0.0
    %222 = vmatpush1.msra.mxu0 0.0
    %223 = vmatprep.subr.mxu0 0.0
    %224 = vmatpush1.msra.mxu0 0.0
    %225 = vmatprep.subr.mxu0 0.0
    %226 = vmatpush1.msra.mxu0 0.0
    %227 = vmatprep.subr.mxu0 0.0
    %228 = vmatpush1.msra.mxu0 0.0
    %229 = vmatprep.subr.mxu0 0.0
    %230 = vmatpush1.msra.mxu0 0.0
    %231 = vmatprep.mubr.f32.mxu0 0.0
    %232 = vmatmul.mubr.f32.gmra.mrb[0].mxu0 %v162
    %v233 = vpop.f32.mrb[0].mxu0
    %v234 = vadd.f32 %v166, %v233
    %v235 = vpop.f32.mrb[0].mxu0
    %236 = vdwg.mxu0
    %v237 = vmax.f32 %v234, 0.0
    %vm238 = vcmask 408960
    %v239 = vsel %vm238, %v234, -inf
    %240 = vmax.xlane.f32.xlu0 %v239
    %v241 = vpop.xlane.xlu0 %240
    %v242 = vsub.f32 %v234, %v241
    %v243 = vmul.f32 %v242, 1.442695
    %v244 = vpow.pop %v243
    %246 = vrot.lane.b32.xlu0 %v244, 80
    %v247 = vpop.permute.xlu0 %246
    %vm249 = vcmask 15360
    %v250 = vsel %vm249, %v247, 0.0
    %251 = vadd.xlane.f32.xlu0 %v250
    %v252 = vpop.xlane.xlu0 %251
    %v253 = vrcp.pop %v252
    %v254 = vmul.f32 %v244, %v253
    %256 = vset.pattern.permute.xlu0 48
    %257 = vperm.xlu0 %256, %v254
    %v258 = vpop.permute.xlu0 %257
    %v260 = vmul.f32 %v258, %v237
    %261 = vset.pattern.permute.xlu0 49
    %262 = vperm.xlu0 %261, %v254
    %v263 = vpop.permute.xlu0 %262
    %v265 = vmul.f32 %v263, %v237
    %267 = vrot.lane.b32.xlu0 %v265, 96
    %v268 = vpop.permute.xlu0 %267
    %v270 = vadd.f32 %v260, %v268
    %vm271 = vcmask 425360
    %v272 = vsel %vm271, %v234, -inf
    %273 = vmax.xlane.f32.xlu0 %v272
    %v274 = vpop.xlane.xlu0 %273
    %v275 = vsub.f32 %v234, %v274
    %v276 = vmul.f32 %v275, 1.442695
    %v277 = vpow.pop %v276
    %279 = vrot.lane.b32.xlu0 %v277, 78
    %v280 = vpop.permute.xlu0 %279
    %v282 = vsel %vm249, %v280, 0.0
    %283 = vadd.xlane.f32.xlu0 %v282
    %v284 = vpop.xlane.xlu0 %283
    %v285 = vrcp.pop %v284
    %v286 = vmul.f32 %v277, %v285
    %288 = vset.pattern.permute.xlu0 50
    %289 = vperm.xlu0 %288, %v286
    %v290 = vpop.permute.xlu0 %289
    %v292 = vmul.f32 %v290, %v237
    %293 = vset.pattern.permute.xlu0 51
    %294 = vperm.xlu0 %293, %v286
    %v295 = vpop.permute.xlu0 %294
    %v297 = vmul.f32 %v295, %v237
    %299 = vrot.lane.b32.xlu0 %v297, 112
    %v300 = vpop.permute.xlu0 %299
    %v302 = vadd.f32 %v292, %v300
    %vm303 = vcmask 449952
    %v304 = vsel %vm303, %v234, -inf
    %305 = vmax.xlane.f32.xlu0 %v304
    %v306 = vpop.xlane.xlu0 %305
    %v307 = vsub.f32 %v234, %v306
    %v308 = vmul.f32 %v307, 1.442695
    %v309 = vpow.pop %v308
    %311 = vrot.lane.b32.xlu0 %v309, 76
    %v312 = vpop.permute.xlu0 %311
    %vm314 = vcmask 23552
    %v315 = vsel %vm314, %v312, 0.0
    %316 = vadd.xlane.f32.xlu0 %v315
    %v317 = vpop.xlane.xlu0 %316
    %v318 = vrcp.pop %v317
    %v319 = vmul.f32 %v309, %v318
    %321 = vset.pattern.permute.xlu0 52
    %322 = vperm.xlu0 %321, %v319
    %v323 = vpop.permute.xlu0 %322
    %v325 = vmul.f32 %v323, %v237
    %326 = vset.pattern.permute.xlu0 53
    %327 = vperm.xlu0 %326, %v319
    %v328 = vpop.permute.xlu0 %327
    %v330 = vmul.f32 %v328, %v237
    %332 = vrot.lane.b32.xlu0 %v330, 112
    %v333 = vpop.permute.xlu0 %332
    %v335 = vadd.f32 %v325, %v333
    %336 = vset.pattern.permute.xlu0 54
    %337 = vperm.xlu0 %336, %v319
    %v338 = vpop.permute.xlu0 %337
    %v340 = vmul.f32 %v338, %v237
    %342 = vrot.lane.b32.xlu0 %v340, 96
    %v343 = vpop.permute.xlu0 %342
    %v345 = vadd.f32 %v335, %v343
    %347 = vrot.lane.b32.xlu0 %v345, 32
    %v348 = vpop.permute.xlu0 %347
    %vm350 = vcmask 130048
    %v351 = vsel %vm350, %v270, %v302
    %vm352 = vcmask 261120
    %v353 = vsel %vm352, %v351, %v348
    %vm354 = vcmask 392192
    %v355 = vsel %vm354, %v353, 0.0
    %s356 = scalar_lea.vmem [#allocation5], 256
    %v357 = vld [vmem:[%s356] sm:$0xff]
    %v358 = vld [vmem:[%s356 + $0x8] sm:$0xff]
    %v359 = vld [vmem:[%s356 + $0x10] sm:$0xff]
    %v360 = vld [vmem:[%s356 + $0x18] sm:$0xff]
    %v361 = vld [vmem:[%s356 + $0x20] sm:$0xff]
    %v362 = vld [vmem:[%s356 + $0x28] sm:$0xff]
    %v363 = vld [vmem:[%s356 + $0x30] sm:$0xff]
    %v364 = vld [vmem:[%s356 + $0x38] sm:$0xff]
    %v365 = vld [vmem:[%s356 + $0x40] sm:$0xff]
    %v366 = vld [vmem:[%s356 + $0x48] sm:$0xff]
    %v367 = vld [vmem:[%s356 + $0x50] sm:$0xff]
    %v368 = vld [vmem:[%s356 + $0x58] sm:$0xff]
    %v369 = vld [vmem:[%s356 + $0x60] sm:$0xff]
    %v370 = vld [vmem:[%s356 + $0x68] sm:$0xff]
    %v371 = vld [vmem:[%s356 + $0x70] sm:$0xff]
    %v372 = vld [vmem:[%s356 + $0x78] sm:$0xff]
    %s373 = scalar_lea.vmem [#allocation5], 384
    %v374 = vld [vmem:[%s373] sm:$0xff]
    %v375 = vld [vmem:[%s373 + $0x8] sm:$0xff]
    %v376 = vld [vmem:[%s373 + $0x10] sm:$0xff]
    %v377 = vld [vmem:[%s373 + $0x18] sm:$0xff]
    %v378 = vld [vmem:[%s373 + $0x20] sm:$0xff]
    %v379 = vld [vmem:[%s373 + $0x28] sm:$0xff]
    %v380 = vld [vmem:[%s373 + $0x30] sm:$0xff]
    %v381 = vld [vmem:[%s373 + $0x38] sm:$0xff]
    %v382 = vld [vmem:[%s373 + $0x40] sm:$0xff]
    %v383 = vld [vmem:[%s373 + $0x48] sm:$0xff]
    %v384 = vld [vmem:[%s373 + $0x50] sm:$0xff]
    %v385 = vld [vmem:[%s373 + $0x58] sm:$0xff]
    %v386 = vld [vmem:[%s373 + $0x60] sm:$0xff]
    %v387 = vld [vmem:[%s373 + $0x68] sm:$0xff]
    %v388 = vld [vmem:[%s373 + $0x70] sm:$0xff]
    %v389 = vld [vmem:[%s373 + $0x78] sm:$0xff]
    %v390 = vld [vmem:[#allocation7 + $0x2] sm:$0x1]
    %v391 = vld [vmem:[#allocation7 + $0x3] sm:$0x1]
    %v392 = vlaneseq
    %v393 = vshrl.u32 %v392, 7
    %v394 = vsub.s32 0, %v393
    %v395 = vrot.slane %v390, %v394
    %396 = vmatprep.subr.mxu0 0.0
    %397 = vmatpush1.msra.mxu0 %v357
    %398 = vmatprep.subr.mxu0 0.0
    %399 = vmatpush1.msra.mxu0 %v358
    %400 = vmatprep.subr.mxu0 0.0
    %401 = vmatpush1.msra.mxu0 %v359
    %402 = vmatprep.subr.mxu0 0.0
    %403 = vmatpush1.msra.mxu0 %v360
    %404 = vmatprep.subr.mxu0 0.0
    %405 = vmatpush1.msra.mxu0 %v361
    %406 = vmatprep.subr.mxu0 0.0
    %407 = vmatpush1.msra.mxu0 %v362
    %408 = vmatprep.subr.mxu0 0.0
    %409 = vmatpush1.msra.mxu0 %v363
    %410 = vmatprep.subr.mxu0 0.0
    %411 = vmatpush1.msra.mxu0 %v364
    %412 = vmatprep.subr.mxu0 0.0
    %413 = vmatpush1.msra.mxu0 %v365
    %414 = vmatprep.subr.mxu0 0.0
    %415 = vmatpush1.msra.mxu0 %v366
    %416 = vmatprep.subr.mxu0 0.0
    %417 = vmatpush1.msra.mxu0 %v367
    %418 = vmatprep.subr.mxu0 0.0
    %419 = vmatpush1.msra.mxu0 %v368
    %420 = vmatprep.subr.mxu0 0.0
    %421 = vmatpush1.msra.mxu0 %v369
    %422 = vmatprep.subr.mxu0 0.0
    %423 = vmatpush1.msra.mxu0 %v370
    %424 = vmatprep.subr.mxu0 0.0
    %425 = vmatpush1.msra.mxu0 %v371
    %426 = vmatprep.subr.mxu0 0.0
    %427 = vmatpush1.msra.mxu0 %v372
    %428 = vmatprep.subr.mxu0 0.0
    %429 = vmatpush1.msra.mxu0 0.0
    %430 = vmatprep.subr.mxu0 0.0
    %431 = vmatpush1.msra.mxu0 0.0
    %432 = vmatprep.subr.mxu0 0.0
    %433 = vmatpush1.msra.mxu0 0.0
    %434 = vmatprep.subr.mxu0 0.0
    %435 = vmatpush1.msra.mxu0 0.0
    %436 = vmatprep.subr.mxu0 0.0
    %437 = vmatpush1.msra.mxu0 0.0
    %438 = vmatprep.subr.mxu0 0.0
    %439 = vmatpush1.msra.mxu0 0.0
    %440 = vmatprep.subr.mxu0 0.0
    %441 = vmatpush1.msra.mxu0 0.0
    %442 = vmatprep.subr.mxu0 0.0
    %443 = vmatpush1.msra.mxu0 0.0
    %444 = vmatprep.subr.mxu0 0.0
    %445 = vmatpush1.msra.mxu0 0.0
    %446 = vmatprep.subr.mxu0 0.0
    %447 = vmatpush1.msra.mxu0 0.0
    %448 = vmatprep.subr.mxu0 0.0
    %449 = vmatpush1.msra.mxu0 0.0
    %450 = vmatprep.subr.mxu0 0.0
    %451 = vmatpush1.msra.mxu0 0.0
    %452 = vmatprep.subr.mxu0 0.0
    %453 = vmatpush1.msra.mxu0 0.0
    %454 = vmatprep.subr.mxu0 0.0
    %455 = vmatpush1.msra.mxu0 0.0
    %456 = vmatprep.subr.mxu0 0.0
    %457 = vmatpush1.msra.mxu0 0.0
    %458 = vmatprep.subr.mxu0 0.0
    %459 = vmatpush1.msra.mxu0 0.0
    %460 = vmatprep.mubr.f32.mxu0 0.0
    %461 = vmatmul.mubr.f32.gmra.mrb[0].mxu0 %v355
    %v462 = vpop.f32.mrb[0].mxu0
    %v463 = vadd.f32 %v395, %v462
    %v464 = vpop.f32.mrb[0].mxu0
    %465 = vdwg.mxu0
    %v466 = vmax.f32 %v463, 0.0
    %v467 = vlaneseq
    %v468 = vshrl.u32 %v467, 7
    %v469 = vsub.s32 0, %v468
    %v470 = vrot.slane %v391, %v469
    %471 = vmatprep.subr.mxu0 0.0
    %472 = vmatpush1.msra.mxu0 %v374
    %473 = vmatprep.subr.mxu0 0.0
    %474 = vmatpush1.msra.mxu0 %v375
    %475 = vmatprep.subr.mxu0 0.0
    %476 = vmatpush1.msra.mxu0 %v376
    %477 = vmatprep.subr.mxu0 0.0
    %478 = vmatpush1.msra.mxu0 %v377
    %479 = vmatprep.subr.mxu0 0.0
    %480 = vmatpush1.msra.mxu0 %v378
    %481 = vmatprep.subr.mxu0 0.0
    %482 = vmatpush1.msra.mxu0 %v379
    %483 = vmatprep.subr.mxu0 0.0
    %484 = vmatpush1.msra.mxu0 %v380
    %485 = vmatprep.subr.mxu0 0.0
    %486 = vmatpush1.msra.mxu0 %v381
    %487 = vmatprep.subr.mxu0 0.0
    %488 = vmatpush1.msra.mxu0 %v382
    %489 = vmatprep.subr.mxu0 0.0
    %490 = vmatpush1.msra.mxu0 %v383
    %491 = vmatprep.subr.mxu0 0.0
    %492 = vmatpush1.msra.mxu0 %v384
    %493 = vmatprep.subr.mxu0 0.0
    %494 = vmatpush1.msra.mxu0 %v385
    %495 = vmatprep.subr.mxu0 0.0
    %496 = vmatpush1.msra.mxu0 %v386
    %497 = vmatprep.subr.mxu0 0.0
    %498 = vmatpush1.msra.mxu0 %v387
    %499 = vmatprep.subr.mxu0 0.0
    %500 = vmatpush1.msra.mxu0 %v388
    %501 = vmatprep.subr.mxu0 0.0
    %502 = vmatpush1.msra.mxu0 %v389
    %503 = vmatprep.subr.mxu0 0.0
    %504 = vmatpush1.msra.mxu0 0.0
    %505 = vmatprep.subr.mxu0 0.0
    %506 = vmatpush1.msra.mxu0 0.0
    %507 = vmatprep.subr.mxu0 0.0
    %508 = vmatpush1.msra.mxu0 0.0
    %509 = vmatprep.subr.mxu0 0.0
    %510 = vmatpush1.msra.mxu0 0.0
    %511 = vmatprep.subr.mxu0 0.0
    %512 = vmatpush1.msra.mxu0 0.0
    %513 = vmatprep.subr.mxu0 0.0
    %514 = vmatpush1.msra.mxu0 0.0
    %515 = vmatprep.subr.mxu0 0.0
    %516 = vmatpush1.msra.mxu0 0.0
    %517 = vmatprep.subr.mxu0 0.0
    %518 = vmatpush1.msra.mxu0 0.0
    %519 = vmatprep.subr.mxu0 0.0
    %520 = vmatpush1.msra.mxu0 0.0
    %521 = vmatprep.subr.mxu0 0.0
    %522 = vmatpush1.msra.mxu0 0.0
    %523 = vmatprep.subr.mxu0 0.0
    %524 = vmatpush1.msra.mxu0 0.0
    %525 = vmatprep.subr.mxu0 0.0
    %526 = vmatpush1.msra.mxu0 0.0
    %527 = vmatprep.subr.mxu0 0.0
    %528 = vmatpush1.msra.mxu0 0.0
    %529 = vmatprep.subr.mxu0 0.0
    %530 = vmatpush1.msra.mxu0 0.0
    %531 = vmatprep.subr.mxu0 0.0
    %532 = vmatpush1.msra.mxu0 0.0
    %533 = vmatprep.subr.mxu0 0.0
    %534 = vmatpush1.msra.mxu0 0.0
    %535 = vmatprep.mubr.f32.mxu0 0.0
    %536 = vmatmul.mubr.f32.gmra.mrb[0].mxu0 %v466
    %v537 = vpop.f32.mrb[0].mxu0
    %v538 = vadd.f32 %v470, %v537
    %v539 = vpop.f32.mrb[0].mxu0
    %540 = vdwg.mxu0
    %v541 = vmax.f32 %v538, 0.0
    %v542 = vsel %vm238, %v538, -inf
    %543 = vmax.xlane.f32.xlu0 %v542
    %v544 = vpop.xlane.xlu0 %543
    %v545 = vsub.f32 %v538, %v544
    %v546 = vmul.f32 %v545, 1.442695
    %v547 = vpow.pop %v546
    %549 = vrot.lane.b32.xlu0 %v547, 80
    %v550 = vpop.permute.xlu0 %549
    %v552 = vsel %vm249, %v550, 0.0
    %553 = vadd.xlane.f32.xlu0 %v552
    %v554 = vpop.xlane.xlu0 %553
    %v555 = vrcp.pop %v554
    %v556 = vmul.f32 %v547, %v555
    %558 = vset.pattern.permute.xlu0 48
    %559 = vperm.xlu0 %558, %v556
    %v560 = vpop.permute.xlu0 %559
    %v562 = vmul.f32 %v560, %v541
    %563 = vset.pattern.permute.xlu0 49
    %564 = vperm.xlu0 %563, %v556
    %v565 = vpop.permute.xlu0 %564
    %v567 = vmul.f32 %v565, %v541
    %569 = vrot.lane.b32.xlu0 %v567, 96
    %v570 = vpop.permute.xlu0 %569
    %v572 = vadd.f32 %v562, %v570
    %v573 = vsel %vm271, %v538, -inf
    %574 = vmax.xlane.f32.xlu0 %v573
    %v575 = vpop.xlane.xlu0 %574
    %v576 = vsub.f32 %v538, %v575
    %v577 = vmul.f32 %v576, 1.442695
    %v578 = vpow.pop %v577
    %580 = vrot.lane.b32.xlu0 %v578, 78
    %v581 = vpop.permute.xlu0 %580
    %v583 = vsel %vm249, %v581, 0.0
    %584 = vadd.xlane.f32.xlu0 %v583
    %v585 = vpop.xlane.xlu0 %584
    %v586 = vrcp.pop %v585
    %v587 = vmul.f32 %v578, %v586
    %589 = vset.pattern.permute.xlu0 50
    %590 = vperm.xlu0 %589, %v587
    %v591 = vpop.permute.xlu0 %590
    %v593 = vmul.f32 %v591, %v541
    %594 = vset.pattern.permute.xlu0 51
    %595 = vperm.xlu0 %594, %v587
    %v596 = vpop.permute.xlu0 %595
    %v598 = vmul.f32 %v596, %v541
    %600 = vrot.lane.b32.xlu0 %v598, 112
    %v601 = vpop.permute.xlu0 %600
    %v603 = vadd.f32 %v593, %v601
    %v604 = vsel %vm303, %v538, -inf
    %605 = vmax.xlane.f32.xlu0 %v604
    %v606 = vpop.xlane.xlu0 %605
    %v607 = vsub.f32 %v538, %v606
    %v608 = vmul.f32 %v607, 1.442695
    %v609 = vpow.pop %v608
    %611 = vrot.lane.b32.xlu0 %v609, 76
    %v612 = vpop.permute.xlu0 %611
    %v614 = vsel %vm314, %v612, 0.0
    %615 = vadd.xlane.f32.xlu0 %v614
    %v616 = vpop.xlane.xlu0 %615
    %v617 = vrcp.pop %v616
    %v618 = vmul.f32 %v609, %v617
    %620 = vset.pattern.permute.xlu0 52
    %621 = vperm.xlu0 %620, %v618
    %v622 = vpop.permute.xlu0 %621
    %v624 = vmul.f32 %v622, %v541
    %625 = vset.pattern.permute.xlu0 53
    %626 = vperm.xlu0 %625, %v618
    %v627 = vpop.permute.xlu0 %626
    %v629 = vmul.f32 %v627, %v541
    %631 = vrot.lane.b32.xlu0 %v629, 112
    %v632 = vpop.permute.xlu0 %631
    %v634 = vadd.f32 %v624, %v632
    %635 = vset.pattern.permute.xlu0 54
    %636 = vperm.xlu0 %635, %v618
    %v637 = vpop.permute.xlu0 %636
    %v639 = vmul.f32 %v637, %v541
    %641 = vrot.lane.b32.xlu0 %v639, 96
    %v642 = vpop.permute.xlu0 %641
    %v644 = vadd.f32 %v634, %v642
    %646 = vrot.lane.b32.xlu0 %v644, 32
    %v647 = vpop.permute.xlu0 %646
    %v649 = vsel %vm350, %v572, %v603
    %v650 = vsel %vm352, %v649, %v647
    %v651 = vsel %vm354, %v650, 0.0
    %v652 = vld [vmem:[#allocation7 + $0x4] sm:$0x1]
    %s653 = scalar_lea.vmem [#allocation5], 512
    %v654 = vld [vmem:[%s653] sm:$0xff]
    %v655 = vld [vmem:[%s653 + $0x8] sm:$0xff]
    %v656 = vld [vmem:[%s653 + $0x10] sm:$0xff]
    %v657 = vld [vmem:[%s653 + $0x18] sm:$0xff]
    %v658 = vld [vmem:[%s653 + $0x20] sm:$0xff]
    %v659 = vld [vmem:[%s653 + $0x28] sm:$0xff]
    %v660 = vld [vmem:[%s653 + $0x30] sm:$0xff]
    %v661 = vld [vmem:[%s653 + $0x38] sm:$0xff]
    %v662 = vld [vmem:[%s653 + $0x40] sm:$0xff]
    %v663 = vld [vmem:[%s653 + $0x48] sm:$0xff]
    %v664 = vld [vmem:[%s653 + $0x50] sm:$0xff]
    %v665 = vld [vmem:[%s653 + $0x58] sm:$0xff]
    %v666 = vld [vmem:[%s653 + $0x60] sm:$0xff]
    %v667 = vld [vmem:[%s653 + $0x68] sm:$0xff]
    %v668 = vld [vmem:[%s653 + $0x70] sm:$0xff]
    %v669 = vld [vmem:[%s653 + $0x78] sm:$0xff]
    %v670 = vlaneseq
    %v671 = vshrl.u32 %v670, 7
    %v672 = vsub.s32 0, %v671
    %v673 = vrot.slane %v652, %v672
    %674 = vmatprep.subr.mxu0 0.0
    %675 = vmatpush1.msra.mxu0 %v654
    %676 = vmatprep.subr.mxu0 0.0
    %677 = vmatpush1.msra.mxu0 %v655
    %678 = vmatprep.subr.mxu0 0.0
    %679 = vmatpush1.msra.mxu0 %v656
    %680 = vmatprep.subr.mxu0 0.0
    %681 = vmatpush1.msra.mxu0 %v657
    %682 = vmatprep.subr.mxu0 0.0
    %683 = vmatpush1.msra.mxu0 %v658
    %684 = vmatprep.subr.mxu0 0.0
    %685 = vmatpush1.msra.mxu0 %v659
    %686 = vmatprep.subr.mxu0 0.0
    %687 = vmatpush1.msra.mxu0 %v660
    %688 = vmatprep.subr.mxu0 0.0
    %689 = vmatpush1.msra.mxu0 %v661
    %690 = vmatprep.subr.mxu0 0.0
    %691 = vmatpush1.msra.mxu0 %v662
    %692 = vmatprep.subr.mxu0 0.0
    %693 = vmatpush1.msra.mxu0 %v663
    %694 = vmatprep.subr.mxu0 0.0
    %695 = vmatpush1.msra.mxu0 %v664
    %696 = vmatprep.subr.mxu0 0.0
    %697 = vmatpush1.msra.mxu0 %v665
    %698 = vmatprep.subr.mxu0 0.0
    %699 = vmatpush1.msra.mxu0 %v666
    %700 = vmatprep.subr.mxu0 0.0
    %701 = vmatpush1.msra.mxu0 %v667
    %702 = vmatprep.subr.mxu0 0.0
    %703 = vmatpush1.msra.mxu0 %v668
    %704 = vmatprep.subr.mxu0 0.0
    %705 = vmatpush1.msra.mxu0 %v669
    %706 = vmatprep.subr.mxu0 0.0
    %707 = vmatpush1.msra.mxu0 0.0
    %708 = vmatprep.subr.mxu0 0.0
    %709 = vmatpush1.msra.mxu0 0.0
    %710 = vmatprep.subr.mxu0 0.0
    %711 = vmatpush1.msra.mxu0 0.0
    %712 = vmatprep.subr.mxu0 0.0
    %713 = vmatpush1.msra.mxu0 0.0
    %714 = vmatprep.subr.mxu0 0.0
    %715 = vmatpush1.msra.mxu0 0.0
    %716 = vmatprep.subr.mxu0 0.0
    %717 = vmatpush1.msra.mxu0 0.0
    %718 = vmatprep.subr.mxu0 0.0
    %719 = vmatpush1.msra.mxu0 0.0
    %720 = vmatprep.subr.mxu0 0.0
    %721 = vmatpush1.msra.mxu0 0.0
    %722 = vmatprep.subr.mxu0 0.0
    %723 = vmatpush1.msra.mxu0 0.0
    %724 = vmatprep.subr.mxu0 0.0
    %725 = vmatpush1.msra.mxu0 0.0
    %726 = vmatprep.subr.mxu0 0.0
    %727 = vmatpush1.msra.mxu0 0.0
    %728 = vmatprep.subr.mxu0 0.0
    %729 = vmatpush1.msra.mxu0 0.0
    %730 = vmatprep.subr.mxu0 0.0
    %731 = vmatpush1.msra.mxu0 0.0
    %732 = vmatprep.subr.mxu0 0.0
    %733 = vmatpush1.msra.mxu0 0.0
    %734 = vmatprep.subr.mxu0 0.0
    %735 = vmatpush1.msra.mxu0 0.0
    %736 = vmatprep.subr.mxu0 0.0
    %737 = vmatpush1.msra.mxu0 0.0
    %738 = vmatprep.mubr.f32.mxu0 0.0
    %739 = vmatmul.mubr.f32.gmra.mrb[0].mxu0 %v651
    %v740 = vpop.f32.mrb[0].mxu0
    %v741 = vadd.f32 %v673, %v740
    %v742 = vpop.f32.mrb[0].mxu0
    %743 = vdwg.mxu0
    %v744 = vmax.f32 %v741, 0.0
    %s745 = scalar_lea.vmem [#allocation5], 640
    %v746 = vld [vmem:[%s745] sm:$0xff]
    %v747 = vld [vmem:[%s745 + $0x8] sm:$0xff]
    %v748 = vld [vmem:[%s745 + $0x10] sm:$0xff]
    %v749 = vld [vmem:[%s745 + $0x18] sm:$0xff]
    %v750 = vld [vmem:[%s745 + $0x20] sm:$0xff]
    %v751 = vld [vmem:[%s745 + $0x28] sm:$0xff]
    %v752 = vld [vmem:[%s745 + $0x30] sm:$0xff]
    %v753 = vld [vmem:[%s745 + $0x38] sm:$0xff]
    %v754 = vld [vmem:[%s745 + $0x40] sm:$0xff]
    %v755 = vld [vmem:[%s745 + $0x48] sm:$0xff]
    %v756 = vld [vmem:[%s745 + $0x50] sm:$0xff]
    %v757 = vld [vmem:[%s745 + $0x58] sm:$0xff]
    %v758 = vld [vmem:[%s745 + $0x60] sm:$0xff]
    %v759 = vld [vmem:[%s745 + $0x68] sm:$0xff]
    %v760 = vld [vmem:[%s745 + $0x70] sm:$0xff]
    %v761 = vld [vmem:[%s745 + $0x78] sm:$0xff]
    %762 = vmatprep.subr.mxu0 0.0
    %763 = vmatpush1.msra.mxu0 %v746
    %764 = vmatprep.subr.mxu0 0.0
    %765 = vmatpush1.msra.mxu0 %v747
    %766 = vmatprep.subr.mxu0 0.0
    %767 = vmatpush1.msra.mxu0 %v748
    %768 = vmatprep.subr.mxu0 0.0
    %769 = vmatpush1.msra.mxu0 %v749
    %770 = vmatprep.subr.mxu0 0.0
    %771 = vmatpush1.msra.mxu0 %v750
    %772 = vmatprep.subr.mxu0 0.0
    %773 = vmatpush1.msra.mxu0 %v751
    %774 = vmatprep.subr.mxu0 0.0
    %775 = vmatpush1.msra.mxu0 %v752
    %776 = vmatprep.subr.mxu0 0.0
    %777 = vmatpush1.msra.mxu0 %v753
    %778 = vmatprep.subr.mxu0 0.0
    %779 = vmatpush1.msra.mxu0 %v754
    %780 = vmatprep.subr.mxu0 0.0
    %781 = vmatpush1.msra.mxu0 %v755
    %782 = vmatprep.subr.mxu0 0.0
    %783 = vmatpush1.msra.mxu0 %v756
    %784 = vmatprep.subr.mxu0 0.0
    %785 = vmatpush1.msra.mxu0 %v757
    %786 = vmatprep.subr.mxu0 0.0
    %787 = vmatpush1.msra.mxu0 %v758
    %788 = vmatprep.subr.mxu0 0.0
    %789 = vmatpush1.msra.mxu0 %v759
    %790 = vmatprep.subr.mxu0 0.0
    %791 = vmatpush1.msra.mxu0 %v760
    %792 = vmatprep.subr.mxu0 0.0
    %793 = vmatpush1.msra.mxu0 %v761
    %794 = vmatprep.subr.mxu0 0.0
    %795 = vmatpush1.msra.mxu0 0.0
    %796 = vmatprep.subr.mxu0 0.0
    %797 = vmatpush1.msra.mxu0 0.0
    %798 = vmatprep.subr.mxu0 0.0
    %799 = vmatpush1.msra.mxu0 0.0
    %800 = vmatprep.subr.mxu0 0.0
    %801 = vmatpush1.msra.mxu0 0.0
    %802 = vmatprep.subr.mxu0 0.0
    %803 = vmatpush1.msra.mxu0 0.0
    %804 = vmatprep.subr.mxu0 0.0
    %805 = vmatpush1.msra.mxu0 0.0
    %806 = vmatprep.subr.mxu0 0.0
    %807 = vmatpush1.msra.mxu0 0.0
    %808 = vmatprep.subr.mxu0 0.0
    %809 = vmatpush1.msra.mxu0 0.0
    %810 = vmatprep.subr.mxu0 0.0
    %811 = vmatpush1.msra.mxu0 0.0
    %812 = vmatprep.subr.mxu0 0.0
    %813 = vmatpush1.msra.mxu0 0.0
    %814 = vmatprep.subr.mxu0 0.0
    %815 = vmatpush1.msra.mxu0 0.0
    %816 = vmatprep.subr.mxu0 0.0
    %817 = vmatpush1.msra.mxu0 0.0
    %818 = vmatprep.subr.mxu0 0.0
    %819 = vmatpush1.msra.mxu0 0.0
    %820 = vmatprep.subr.mxu0 0.0
    %821 = vmatpush1.msra.mxu0 0.0
    %822 = vmatprep.subr.mxu0 0.0
    %823 = vmatpush1.msra.mxu0 0.0
    %824 = vmatprep.subr.mxu0 0.0
    %825 = vmatpush1.msra.mxu0 0.0
    %826 = vmatprep.mubr.f32.mxu0 0.0
    %827 = vmatmul.mubr.f32.gmra.mrb[0].mxu0 %v744
    %v828 = vpop.f32.mrb[0].mxu0
    %v829 = vadd.f32 0.0, %v828
    %v830 = vpop.f32.mrb[0].mxu0
    %831 = vdwg.mxu0
    %v832 = vxor.u32 %v829, 2147483648
    %v833 = vmul.f32 %v832, 1.442695
    %v834 = vpow.pop %v833
    %v835 = vadd.f32 %v834, 1.0
    %v836 = vrcp.pop %v835
    %v837 = vmul.f32 1.0, %v836
    %838 = vst [vmem:[#allocation8] sm:$0xff] %v837
    // Predicated region
    $region26: #{tpu_custom_call.1} parent=1 // pred_check
      _
    $region27: #{tpu_custom_call.1} parent=1 // pred_check_branch
      %840 = sbr.rel (0) target = $region29
    $region28: #{tpu_custom_call.1} parent=1 // pred_region
      %s842 = ssub.s32 128, 128
      %843 = vsyncadd [#allocation4], %s842
      %s845 = sshll.u32 [#allocation8], 4
      %s846 = int_to_ptr.vmem [resolvable:$true] %s845
      %848 = dma.vmem_to_hbm [thread:$0]  %s846, 128, %s3, [#allocation4]
    $region29: #{tpu_custom_call.1} parent=1 // pred_fallthru
      _
    // Predicated region
    $region30: #{tpu_custom_call.1} parent=1 // pred_check
      _
    $region31: #{tpu_custom_call.1} parent=1 // pred_check_branch
      %850 = sbr.rel (0) target = $region33
    $region32: #{tpu_custom_call.1} parent=1 // pred_region
      %851 = dma.done [#allocation4], 128
    $region33: #{tpu_custom_call.1} parent=1 // pred_fallthru
      _
    %852 = vsyncpa [#allocation3], 1
    %853 = vsyncpa [#allocation6], 1
    %854 = vsyncpa [#allocation4], 1

</llo_original>
